<compile_context>
chip_gen: v7x
topology: tpu7x:2x2x1
jax: 0.10.0
libtpu: 0.0.40
codegen_flags: <defaults>
</compile_context>

<pallas_src>
import functools

import jax
import jax.numpy as jnp
from jax import lax
from jax.experimental import pallas as pl
from jax.experimental.pallas import tpu as pltpu
from jax.scipy.special import gammaln, digamma


def _loss_kernel(rate_ref, w1_ref, w2_ref, *rest,
                 eps, num_s, recon_scale, inv_p):
    if recon_scale != 0.0:
        counts_ref, out_ref = rest
    else:
        (out_ref,) = rest

    inv_s = 1.0 / float(num_s)

    # Single pass over the rate tile: upcast per-vreg, one EUP log per element,
    # S-reduction is a sublane reduce over the whole block (no per-s slicing).
    r = rate_ref[...].astype(jnp.float32)                 # (tb, S, P)
    mean_rate = jnp.sum(r, axis=1) * inv_s                # (tb, P)
    mean_log = jnp.sum(jnp.log(r + eps), axis=1) * inv_s  # (tb, P)

    w1 = w1_ref[...]                                      # mask * counts
    w2 = w2_ref[...]                                      # mask

    # Partial Poisson log-likelihood; the counts-only constant
    # sum_P(mask * (eps + lgamma(counts+1))) is added back in glue.
    ll_part = jnp.sum(w1 * mean_log - w2 * mean_rate, axis=1, keepdims=True)
    neg_ll = -ll_part                                     # (tb, 1)

    if recon_scale != 0.0:
        counts = counts_ref[...]
        recon = jnp.abs(mean_rate - counts) / (counts + eps)   # exact divide
        recon_b = jnp.sum(recon, axis=1, keepdims=True) * (inv_p * recon_scale)
    else:
        recon_b = jnp.zeros_like(neg_ll)

    # Pack both per-batch scalars into one lane-dense (tb, 128) slab:
    # column 0 = partial neg_ll, column 1 = scaled recon. Unmasked vst.
    col = lax.broadcasted_iota(jnp.int32, out_ref.shape, 1)
    out_ref[...] = (jnp.where(col == 0, neg_ll, 0.0)
                    + jnp.where(col == 1, recon_b, 0.0))


def _gamma_gamma_kl(q_conc, q_rate, p_conc, p_rate):
    """KL( Gamma(q_conc, q_rate) || Gamma(p_conc, p_rate) ).

    Matches torch.distributions.kl._kl_gamma_gamma(q_dist, p_dist).
    """
    t1 = p_conc * jnp.log(q_rate / p_rate)
    t2 = gammaln(p_conc) - gammaln(q_conc)
    t3 = (q_conc - p_conc) * digamma(q_conc)
    t4 = (p_rate - q_rate) * (q_conc / q_rate)
    return t1 + t2 + t3 + t4


def loss_forward(rate, counts, dead_pixel_mask,
                 q_bg_conc, q_bg_rate, q_I_conc, q_I_rate,
                 p_bg_conc, p_bg_rate, p_I_conc, p_I_rate,
                 *, eps=1e-5, recon_scale=0.0,
                 p_bg_scale=1e-4, p_I_scale=1e-4):
    B, S, P = rate.shape
    counts_f = counts.astype(jnp.float32)
    mask = dead_pixel_mask.reshape(B, P).astype(jnp.float32)   # .squeeze(-1)

    # ---- Gamma-Gamma analytic KL terms (tiny O(B) glue; needs lgamma/digamma).
    kl_bg = _gamma_gamma_kl(q_bg_conc, q_bg_rate, p_bg_conc, p_bg_rate)   # (B,)
    kl_I = _gamma_gamma_kl(q_I_conc, q_I_rate, p_I_conc, p_I_rate)        # (B,)
    kl_terms = (kl_bg * p_bg_scale + kl_I * p_I_scale).astype(jnp.float32)

    # ---- Fold the counts-only constant out of the kernel (one less HBM stream).
    logfact = gammaln(counts_f + 1.0)                      # lgamma(counts + 1)
    const_b = jnp.sum(mask * (eps + logfact), axis=1)      # (B,)
    w1 = mask * counts_f                                   # (B, P)
    w2 = mask                                              # (B, P)

    # ---- Batch tile selection (no padding; partial last tile is allowed).
    itemsize = jnp.dtype(rate.dtype).itemsize
    bytes_per_row = S * P * itemsize
    tile_bytes = 8 * 1024 * 1024                           # ~8 MiB of rate/tile
    if B <= 8:
        tb = B                                             # full-dim block (legal)
    else:
        budget_rows = max(8, ((tile_bytes // max(1, bytes_per_row)) // 8) * 8)
        half_b = ((-(-B // 2)) + 7) // 8 * 8               # >= 2 grid steps (v7x)
        tb = max(8, min(budget_rows, half_b))
    nb = -(-B // tb)

    kernel = functools.partial(_loss_kernel, eps=float(eps),
                               recon_scale=float(recon_scale),
                               num_s=int(S), inv_p=1.0 / float(P))

    in_specs = [
        pl.BlockSpec((tb, S, P), lambda i: (i, 0, 0)),     # rate (full S, P dims)
        pl.BlockSpec((tb, P), lambda i: (i, 0)),           # w1 = mask * counts
        pl.BlockSpec((tb, P), lambda i: (i, 0)),           # w2 = mask
    ]
    args = [rate, w1, w2]
    n_small = 2
    if float(recon_scale) != 0.0:
        in_specs.append(pl.BlockSpec((tb, P), lambda i: (i, 0)))   # counts
        args.append(counts_f)
        n_small = 3

    cost = pl.CostEstimate(
        flops=6 * B * S * P,
        transcendentals=B * S * P,
        bytes_accessed=B * S * P * itemsize + 4 * (n_small * B * P + B * 128))

    out = pl.pallas_call(
        kernel,
        out_shape=jax.ShapeDtypeStruct((B, 128), jnp.float32),
        grid=(nb,),
        in_specs=in_specs,
        out_specs=pl.BlockSpec((tb, 128), lambda i: (i, 0)),
        compiler_params=pltpu.CompilerParams(
            dimension_semantics=("parallel",),
            vmem_limit_bytes=48 * 1024 * 1024),
        cost_estimate=cost,
    )(*args)

    neg_ll_b = out[:B, 0] + const_b      # (B,) add back counts-only constant
    recon_b = out[:B, 1]                 # (B,) already scaled by recon_scale

    batch_loss = neg_ll_b + kl_terms + recon_b
    total_loss = jnp.mean(batch_loss)
    return (total_loss,
            jnp.mean(neg_ll_b),
            jnp.mean(kl_terms),
            jnp.mean(recon_b),
            jnp.mean(kl_bg),
            jnp.mean(kl_I),
            0.0)


def _reference_forward(rate, counts, dead_pixel_mask,
                       q_bg_conc, q_bg_rate, q_I_conc, q_I_rate,
                       p_bg_conc, p_bg_rate, p_I_conc, p_I_rate,
                       *, eps=1e-5, recon_scale=0.0,
                       p_bg_scale=1e-4, p_I_scale=1e-4):
    """Pure-JAX mirror of the PyTorch forward for the same config (sanity check)."""
    B, S, P = rate.shape
    rate = rate.astype(jnp.float32)
    counts = counts.astype(jnp.float32)
    mask = dead_pixel_mask.reshape(B, P).astype(jnp.float32)

    lam = rate + eps
    ll = counts[:, None, :] * jnp.log(lam) - lam - gammaln(counts + 1.0)[:, None, :]
    ll_mean = jnp.mean(ll, axis=1) * mask
    neg_ll_batch = -jnp.sum(ll_mean, axis=1)

    kl_bg = _gamma_gamma_kl(q_bg_conc, q_bg_rate, p_bg_conc, p_bg_rate)
    kl_I = _gamma_gamma_kl(q_I_conc, q_I_rate, p_I_conc, p_I_rate)
    kl_terms = kl_bg * p_bg_scale + kl_I * p_I_scale

    recon = jnp.abs(jnp.mean(rate, axis=1) - counts) / (counts + eps)
    recon_b = jnp.mean(recon, axis=1) * recon_scale

    batch_loss = neg_ll_batch + kl_terms + recon_b
    return (jnp.mean(batch_loss), jnp.mean(neg_ll_batch), jnp.mean(kl_terms),
            jnp.mean(recon_b), jnp.mean(kl_bg), jnp.mean(kl_I), 0.0)


if __name__ == "__main__":
    key = jax.random.PRNGKey(0)
    B, S = 2, 8
    P = 3 * 21 * 21   # flattened (3, 21, 21) shoebox, as in the original model

    k1, k2, k3, k4, k5, k6, k7 = jax.random.split(key, 7)

    rate = jnp.exp(jax.random.normal(k1, (B, S, P), dtype=jnp.float32)) * 2.0
    counts = jnp.floor(jnp.exp(jax.random.normal(k2, (B, P), dtype=jnp.float32)) * 3.0)
    dead_pixel_mask = (jax.random.uniform(k3, (B, P, 1)) > 0.05).astype(jnp.float32)

    # Variational Gamma posteriors (per-batch) and Gamma priors (scalars).
    q_bg_conc = jnp.exp(jax.random.normal(k4, (B,))) + 0.5
    q_bg_rate = jnp.exp(jax.random.normal(k5, (B,))) + 0.5
    q_I_conc = jnp.exp(jax.random.normal(k6, (B,))) + 0.5
    q_I_rate = jnp.exp(jax.random.normal(k7, (B,))) + 0.5
    p_bg_conc = jnp.float32(1.0)
    p_bg_rate = jnp.float32(1.0)
    p_I_conc = jnp.float32(2.0)
    p_I_rate = jnp.float32(0.5)

    args = (rate, counts, dead_pixel_mask,
            q_bg_conc, q_bg_rate, q_I_conc, q_I_rate,
            p_bg_conc, p_bg_rate, p_I_conc, p_I_rate)

    # Default module config (recon_scale = 0.0).
    kwargs = dict(eps=1e-5, recon_scale=0.0, p_bg_scale=1e-4, p_I_scale=1e-4)
    out = jax.block_until_ready(loss_forward(*args, **kwargs))
    ref = _reference_forward(*args, **kwargs)
    for a, b in zip(out[:6], ref[:6]):
        assert jnp.allclose(a, b, rtol=2e-3, atol=1e-3), (a, b)

    # Recon branch enabled (exact divide in-kernel).
    kwargs2 = dict(eps=1e-5, recon_scale=0.5, p_bg_scale=1e-4, p_I_scale=1e-4)
    out2 = jax.block_until_ready(loss_forward(*args, **kwargs2))
    ref2 = _reference_forward(*args, **kwargs2)
    for a, b in zip(out2[:6], ref2[:6]):
        assert jnp.allclose(a, b, rtol=2e-3, atol=1e-3), (a, b)

    print("KERNEL_OK")
</pallas_src>

<mosaic_0001>
module attributes {stable_mosaic.version = 11 : i64} {
  func.func @_loss_kernel(%arg0: i32, %arg1: memref<2x8x1323xf32, #tpu.memory_space<vmem>>, %arg2: memref<2x1323xf32, #tpu.memory_space<vmem>>, %arg3: memref<2x1323xf32, #tpu.memory_space<vmem>>, %arg4: memref<2x128xf32, #tpu.memory_space<vmem>>) attributes {dimension_semantics = [#tpu.dimension_semantics<parallel>], iteration_bounds = array<i64: 1>, scalar_prefetch = 0 : i64, scratch_operands = 0 : i64, tpu.core_type = #tpu.core_type<tc>, window_params = [{transform_indices = @transform_0, window_bounds = array<i64: 2, 8, 1323>}, {transform_indices = @transform_1, window_bounds = array<i64: 2, 1323>}, {transform_indices = @transform_2, window_bounds = array<i64: 2, 1323>}, {transform_indices = @transform_3, window_bounds = array<i64: 2, 128>}]} {
    %c0 = arith.constant 0 : index
    %c0_0 = arith.constant 0 : index
    %c0_1 = arith.constant 0 : index
    %0 = vector.load %arg1[%c0, %c0_0, %c0_1] : memref<2x8x1323xf32, #tpu.memory_space<vmem>>, vector<2x8x1323xf32>
    %cst = arith.constant dense<0.000000e+00> : vector<2x1323xf32>
    %1 = vector.multi_reduction <add>, %0, %cst [1] : vector<2x8x1323xf32> to vector<2x1323xf32>
    %cst_2 = arith.constant 1.250000e-01 : f32
    %2 = vector.broadcast %cst_2 : f32 to vector<2x1323xf32>
    %3 = arith.mulf %1, %2 : vector<2x1323xf32>
    %cst_3 = arith.constant 9.99999974E-6 : f32
    %4 = vector.broadcast %cst_3 : f32 to vector<2x8x1323xf32>
    %5 = arith.addf %0, %4 : vector<2x8x1323xf32>
    %6 = math.log %5 : vector<2x8x1323xf32>
    %cst_4 = arith.constant dense<0.000000e+00> : vector<2x1323xf32>
    %7 = vector.multi_reduction <add>, %6, %cst_4 [1] : vector<2x8x1323xf32> to vector<2x1323xf32>
    %cst_5 = arith.constant 1.250000e-01 : f32
    %8 = vector.broadcast %cst_5 : f32 to vector<2x1323xf32>
    %9 = arith.mulf %7, %8 : vector<2x1323xf32>
    %c0_6 = arith.constant 0 : index
    %c0_7 = arith.constant 0 : index
    %10 = vector.load %arg2[%c0_6, %c0_7] : memref<2x1323xf32, #tpu.memory_space<vmem>>, vector<2x1323xf32>
    %c0_8 = arith.constant 0 : index
    %c0_9 = arith.constant 0 : index
    %11 = vector.load %arg3[%c0_8, %c0_9] : memref<2x1323xf32, #tpu.memory_space<vmem>>, vector<2x1323xf32>
    %12 = arith.mulf %10, %9 : vector<2x1323xf32>
    %13 = arith.mulf %11, %3 : vector<2x1323xf32>
    %14 = arith.subf %12, %13 : vector<2x1323xf32>
    %cst_10 = arith.constant dense<0.000000e+00> : vector<2xf32>
    %15 = vector.multi_reduction <add>, %14, %cst_10 [1] : vector<2x1323xf32> to vector<2xf32>
    %16 = vector.shape_cast %15 : vector<2xf32> to vector<2x1xf32>
    %cst_11 = arith.constant 0.000000e+00 : f32
    %17 = vector.broadcast %cst_11 : f32 to vector<2x1xf32>
    %18 = arith.subf %17, %16 : vector<2x1xf32>
    %cst_12 = arith.constant 0.000000e+00 : f32
    %19 = vector.broadcast %cst_12 : f32 to vector<2x1xf32>
    %20 = tpu.iota {dimensions = array<i32: 1>} : vector<2x128xi32>
    %c0_i32 = arith.constant 0 : i32
    %21 = vector.broadcast %c0_i32 : i32 to vector<2x128xi32>
    %22 = arith.cmpi eq, %20, %21 : vector<2x128xi32>
    %cst_13 = arith.constant 0.000000e+00 : f32
    %23 = vector.shape_cast %18 : vector<2x1xf32> to vector<2x1xf32>
    %24 = vector.broadcast %23 : vector<2x1xf32> to vector<2x128xf32>
    %25 = vector.broadcast %cst_13 : f32 to vector<2x128xf32>
    %26 = arith.select %22, %24, %25 : vector<2x128xi1>, vector<2x128xf32>
    %c1_i32 = arith.constant 1 : i32
    %27 = vector.broadcast %c1_i32 : i32 to vector<2x128xi32>
    %28 = arith.cmpi eq, %20, %27 : vector<2x128xi32>
    %cst_14 = arith.constant 0.000000e+00 : f32
    %29 = vector.shape_cast %19 : vector<2x1xf32> to vector<2x1xf32>
    %30 = vector.broadcast %29 : vector<2x1xf32> to vector<2x128xf32>
    %31 = vector.broadcast %cst_14 : f32 to vector<2x128xf32>
    %32 = arith.select %28, %30, %31 : vector<2x128xi1>, vector<2x128xf32>
    %33 = arith.addf %26, %32 : vector<2x128xf32>
    %c0_15 = arith.constant 0 : index
    %c0_16 = arith.constant 0 : index
    %34 = vector.load %arg4[%c0_15, %c0_16] : memref<2x128xf32, #tpu.memory_space<vmem>>, vector<2x128xf32>
    tpu.vector_store %arg4[%c0_15, %c0_16], %33 {strides = array<i32>} : memref<2x128xf32, #tpu.memory_space<vmem>>, vector<2x128xf32>,
    return
  }
  func.func @transform_0(%arg0: i32) -> (i32, i32, i32) {
    %c0_i32 = arith.constant 0 : i32
    %c0_i32_0 = arith.constant 0 : i32
    %c0_i32_1 = arith.constant 0 : i32
    return %arg0, %c0_i32, %c0_i32_0 : i32, i32, i32
  }
  func.func @transform_1(%arg0: i32) -> (i32, i32) {
    %c0_i32 = arith.constant 0 : i32
    %c0_i32_0 = arith.constant 0 : i32
    return %arg0, %c0_i32 : i32, i32
  }
  func.func @transform_2(%arg0: i32) -> (i32, i32) {
    %c0_i32 = arith.constant 0 : i32
    %c0_i32_0 = arith.constant 0 : i32
    return %arg0, %c0_i32 : i32, i32
  }
  func.func @transform_3(%arg0: i32) -> (i32, i32) {
    %c0_i32 = arith.constant 0 : i32
    %c0_i32_0 = arith.constant 0 : i32
    return %arg0, %c0_i32 : i32, i32
  }
}

</mosaic_0001>

<llo_original>
// kernel: tpu_custom_call.1
$region0: #{tpu_custom_call.1}
  #allocation0 [shape = 'u32[]', space=smem, size = 0x4, offset = 0x4, fixed_abs, tag = 'smem constant byte address 0x4 - core index']
  #allocation1 [shape = 'u32[144,128]{1,0:T(1,128)}', space=vmem, size = 0x12000, scoped, tag = 'internal scratch']
  %s0 = inlined_call_operand.hbm [shape: f32[2,8,1323], index: 0, kind: input, shape index: {}]
  %s1 = inlined_call_operand.hbm [shape: f32[2,1323], index: 1, kind: input, shape index: {}]
  %s2 = inlined_call_operand.hbm [shape: f32[2,1323], index: 2, kind: input, shape index: {}]
  %s3 = inlined_call_operand.hbm [shape: f32[2,128], index: 3, kind: output, shape index: {}]
  %s4 = sld [smem:[#allocation0]]
  $region34: #{tpu_custom_call.1} parent=0
    _
  %s6 = ssub.s32 1, %s4
  %s7 = scalar_select 0, %s6, %s4
  $region1: #{tpu_custom_call.1} parent=0
    #allocation2 [shape = 'u8[90112]{0}', space=vmem, size = 0x16000, scoped, tag = 'input window, operand 0, single buffered']
    #allocation3 [shape = 's32[1]{0}', space=sflag, size = 0x4, scoped, tag = 'scoped memory for tpu_custom_call.1']
    #allocation4 [shape = 's32[1]{0}', space=sflag, size = 0x4, scoped, tag = 'scoped memory for tpu_custom_call.1']
    #allocation5 [shape = 'u8[11264]{0}', space=vmem, size = 0x2c00, scoped, tag = 'input window, operand 1, single buffered']
    #allocation6 [shape = 's32[1]{0}', space=sflag, size = 0x4, scoped, tag = 'scoped memory for tpu_custom_call.1']
    #allocation7 [shape = 'u8[11264]{0}', space=vmem, size = 0x2c00, scoped, tag = 'input window, operand 2, single buffered']
    #allocation8 [shape = 'u8[1024]{0}', space=vmem, size = 0x400, scoped, tag = 'output window, operand 0, single buffered']
    %8 = vsyncpa [#allocation3], 0
    %9 = vsyncpa [#allocation6], 0
    %10 = vsyncpa [#allocation4], 0
    // Predicated region
    $region2: #{tpu_custom_call.1} parent=1 // pred_check
      _
    $region3: #{tpu_custom_call.1} parent=1 // pred_check_branch
      %12 = sbr.rel (0) target = $region5
    $region4: #{tpu_custom_call.1} parent=1 // pred_region
      %s14 = ssub.s32 2816, 2816
      %15 = vsyncadd [#allocation3], %s14
      %s16 = sshll.u32 [#allocation2], 4
      %s17 = int_to_ptr.vmem [resolvable:$true] %s16
      %22 = dma.hbm_to_vmem [thread:$0]  %s0, 2816, %s17, [#allocation3], 1408, 1408, 88
    $region5: #{tpu_custom_call.1} parent=1 // pred_fallthru
      _
    // Predicated region
    $region6: #{tpu_custom_call.1} parent=1 // pred_check
      _
    $region7: #{tpu_custom_call.1} parent=1 // pred_check_branch
      %24 = sbr.rel (0) target = $region9
    $region8: #{tpu_custom_call.1} parent=1 // pred_region
      %s26 = ssub.s32 352, 352
      %27 = vsyncadd [#allocation6], %s26
      %s29 = sshll.u32 [#allocation5], 4
      %s30 = int_to_ptr.vmem [resolvable:$true] %s29
      %32 = dma.hbm_to_vmem [thread:$0]  %s1, 352, %s30, [#allocation6]
    $region9: #{tpu_custom_call.1} parent=1 // pred_fallthru
      _
    // Predicated region
    $region10: #{tpu_custom_call.1} parent=1 // pred_check
      _
    $region11: #{tpu_custom_call.1} parent=1 // pred_check_branch
      %34 = sbr.rel (0) target = $region13
    $region12: #{tpu_custom_call.1} parent=1 // pred_region
      %s36 = ssub.s32 352, 352
      %37 = vsyncadd [#allocation6], %s36
      %s39 = sshll.u32 [#allocation7], 4
      %s40 = int_to_ptr.vmem [resolvable:$true] %s39
      %42 = dma.hbm_to_vmem [thread:$0]  %s2, 352, %s40, [#allocation6]
    $region13: #{tpu_custom_call.1} parent=1 // pred_fallthru
      _
    // Predicated region
    $region14: #{tpu_custom_call.1} parent=1 // pred_check
      _
    $region15: #{tpu_custom_call.1} parent=1 // pred_check_branch
      %44 = sbr.rel (0) target = $region17
    $region16: #{tpu_custom_call.1} parent=1 // pred_region
      %45 = dma.done [#allocation3], 2816
    $region17: #{tpu_custom_call.1} parent=1 // pred_fallthru
      _
    // Predicated region
    $region18: #{tpu_custom_call.1} parent=1 // pred_check
      _
    $region19: #{tpu_custom_call.1} parent=1 // pred_check_branch
      %47 = sbr.rel (0) target = $region21
    $region20: #{tpu_custom_call.1} parent=1 // pred_region
      %48 = dma.done [#allocation6], 352
    $region21: #{tpu_custom_call.1} parent=1 // pred_fallthru
      _
    // Predicated region
    $region22: #{tpu_custom_call.1} parent=1 // pred_check
      _
    $region23: #{tpu_custom_call.1} parent=1 // pred_check_branch
      %50 = sbr.rel (0) target = $region25
    $region24: #{tpu_custom_call.1} parent=1 // pred_region
      %51 = dma.done [#allocation6], 352
    $region25: #{tpu_custom_call.1} parent=1 // pred_fallthru
      _
    %v52 = vld [vmem:[#allocation2] sm:$0xff]
    %v53 = vld [vmem:[#allocation2 + $0x8] sm:$0xff]
    %v54 = vld [vmem:[#allocation2 + $0x10] sm:$0xff]
    %v55 = vld [vmem:[#allocation2 + $0x18] sm:$0xff]
    %v56 = vld [vmem:[#allocation2 + $0x20] sm:$0xff]
    %v57 = vld [vmem:[#allocation2 + $0x28] sm:$0xff]
    %v58 = vld [vmem:[#allocation2 + $0x30] sm:$0xff]
    %v59 = vld [vmem:[#allocation2 + $0x38] sm:$0xff]
    %v60 = vld [vmem:[#allocation2 + $0x40] sm:$0xff]
    %v61 = vld [vmem:[#allocation2 + $0x48] sm:$0xff]
    %v62 = vld [vmem:[#allocation2 + $0x50] sm:$0xff]
    %v63 = vld [vmem:[#allocation2 + $0x58] sm:$0xff]
    %v64 = vld [vmem:[#allocation2 + $0x60] sm:$0xff]
    %v65 = vld [vmem:[#allocation2 + $0x68] sm:$0xff]
    %v66 = vld [vmem:[#allocation2 + $0x70] sm:$0xff]
    %v67 = vld [vmem:[#allocation2 + $0x78] sm:$0xff]
    %v68 = vld [vmem:[#allocation2 + $0x80] sm:$0xff]
    %v69 = vld [vmem:[#allocation2 + $0x88] sm:$0xff]
    %v70 = vld [vmem:[#allocation2 + $0x90] sm:$0xff]
    %v71 = vld [vmem:[#allocation2 + $0x98] sm:$0xff]
    %v72 = vld [vmem:[#allocation2 + $0xa0] sm:$0xff]
    %v73 = vld [vmem:[#allocation2 + $0xa8] sm:$0xff]
    %v74 = vrot.slane %v52, 4
    %v75 = vadd.f32 %v52, %v74
    %v76 = vrot.slane %v75, 2
    %v77 = vadd.f32 %v75, %v76
    %v78 = vrot.slane %v77, 1
    %v79 = vadd.f32 %v77, %v78
    %v80 = vrot.slane %v53, 4
    %v81 = vadd.f32 %v53, %v80
    %v82 = vrot.slane %v81, 2
    %v83 = vadd.f32 %v81, %v82
    %v84 = vrot.slane %v83, 1
    %v85 = vadd.f32 %v83, %v84
    %v86 = vrot.slane %v54, 4
    %v87 = vadd.f32 %v54, %v86
    %v88 = vrot.slane %v87, 2
    %v89 = vadd.f32 %v87, %v88
    %v90 = vrot.slane %v89, 1
    %v91 = vadd.f32 %v89, %v90
    %v92 = vrot.slane %v55, 4
    %v93 = vadd.f32 %v55, %v92
    %v94 = vrot.slane %v93, 2
    %v95 = vadd.f32 %v93, %v94
    %v96 = vrot.slane %v95, 1
    %v97 = vadd.f32 %v95, %v96
    %v98 = vrot.slane %v56, 4
    %v99 = vadd.f32 %v56, %v98
    %v100 = vrot.slane %v99, 2
    %v101 = vadd.f32 %v99, %v100
    %v102 = vrot.slane %v101, 1
    %v103 = vadd.f32 %v101, %v102
    %v104 = vrot.slane %v57, 4
    %v105 = vadd.f32 %v57, %v104
    %v106 = vrot.slane %v105, 2
    %v107 = vadd.f32 %v105, %v106
    %v108 = vrot.slane %v107, 1
    %v109 = vadd.f32 %v107, %v108
    %v110 = vrot.slane %v58, 4
    %v111 = vadd.f32 %v58, %v110
    %v112 = vrot.slane %v111, 2
    %v113 = vadd.f32 %v111, %v112
    %v114 = vrot.slane %v113, 1
    %v115 = vadd.f32 %v113, %v114
    %v116 = vrot.slane %v59, 4
    %v117 = vadd.f32 %v59, %v116
    %v118 = vrot.slane %v117, 2
    %v119 = vadd.f32 %v117, %v118
    %v120 = vrot.slane %v119, 1
    %v121 = vadd.f32 %v119, %v120
    %v122 = vrot.slane %v60, 4
    %v123 = vadd.f32 %v60, %v122
    %v124 = vrot.slane %v123, 2
    %v125 = vadd.f32 %v123, %v124
    %v126 = vrot.slane %v125, 1
    %v127 = vadd.f32 %v125, %v126
    %v128 = vrot.slane %v61, 4
    %v129 = vadd.f32 %v61, %v128
    %v130 = vrot.slane %v129, 2
    %v131 = vadd.f32 %v129, %v130
    %v132 = vrot.slane %v131, 1
    %v133 = vadd.f32 %v131, %v132
    %vm134 = vcmask 351232
    %v135 = vsel %vm134, %v62, 0.0
    %v136 = vrot.slane %v135, 4
    %v137 = vadd.f32 %v135, %v136
    %v138 = vrot.slane %v137, 2
    %v139 = vadd.f32 %v137, %v138
    %v140 = vrot.slane %v139, 1
    %v141 = vadd.f32 %v139, %v140
    %v142 = vrot.slane %v63, 4
    %v143 = vadd.f32 %v63, %v142
    %v144 = vrot.slane %v143, 2
    %v145 = vadd.f32 %v143, %v144
    %v146 = vrot.slane %v145, 1
    %v147 = vadd.f32 %v145, %v146
    %v148 = vrot.slane %v64, 4
    %v149 = vadd.f32 %v64, %v148
    %v150 = vrot.slane %v149, 2
    %v151 = vadd.f32 %v149, %v150
    %v152 = vrot.slane %v151, 1
    %v153 = vadd.f32 %v151, %v152
    %v154 = vrot.slane %v65, 4
    %v155 = vadd.f32 %v65, %v154
    %v156 = vrot.slane %v155, 2
    %v157 = vadd.f32 %v155, %v156
    %v158 = vrot.slane %v157, 1
    %v159 = vadd.f32 %v157, %v158
    %v160 = vrot.slane %v66, 4
    %v161 = vadd.f32 %v66, %v160
    %v162 = vrot.slane %v161, 2
    %v163 = vadd.f32 %v161, %v162
    %v164 = vrot.slane %v163, 1
    %v165 = vadd.f32 %v163, %v164
    %v166 = vrot.slane %v67, 4
    %v167 = vadd.f32 %v67, %v166
    %v168 = vrot.slane %v167, 2
    %v169 = vadd.f32 %v167, %v168
    %v170 = vrot.slane %v169, 1
    %v171 = vadd.f32 %v169, %v170
    %v172 = vrot.slane %v68, 4
    %v173 = vadd.f32 %v68, %v172
    %v174 = vrot.slane %v173, 2
    %v175 = vadd.f32 %v173, %v174
    %v176 = vrot.slane %v175, 1
    %v177 = vadd.f32 %v175, %v176
    %v178 = vrot.slane %v69, 4
    %v179 = vadd.f32 %v69, %v178
    %v180 = vrot.slane %v179, 2
    %v181 = vadd.f32 %v179, %v180
    %v182 = vrot.slane %v181, 1
    %v183 = vadd.f32 %v181, %v182
    %v184 = vrot.slane %v70, 4
    %v185 = vadd.f32 %v70, %v184
    %v186 = vrot.slane %v185, 2
    %v187 = vadd.f32 %v185, %v186
    %v188 = vrot.slane %v187, 1
    %v189 = vadd.f32 %v187, %v188
    %v190 = vrot.slane %v71, 4
    %v191 = vadd.f32 %v71, %v190
    %v192 = vrot.slane %v191, 2
    %v193 = vadd.f32 %v191, %v192
    %v194 = vrot.slane %v193, 1
    %v195 = vadd.f32 %v193, %v194
    %v196 = vrot.slane %v72, 4
    %v197 = vadd.f32 %v72, %v196
    %v198 = vrot.slane %v197, 2
    %v199 = vadd.f32 %v197, %v198
    %v200 = vrot.slane %v199, 1
    %v201 = vadd.f32 %v199, %v200
    %v202 = vsel %vm134, %v73, 0.0
    %v203 = vrot.slane %v202, 4
    %v204 = vadd.f32 %v202, %v203
    %v205 = vrot.slane %v204, 2
    %v206 = vadd.f32 %v204, %v205
    %v207 = vrot.slane %v206, 1
    %v208 = vadd.f32 %v206, %v207
    %v209 = vmul.f32 %v79, 0.125
    %v210 = vmul.f32 %v85, 0.125
    %v211 = vmul.f32 %v91, 0.125
    %v212 = vmul.f32 %v97, 0.125
    %v213 = vmul.f32 %v103, 0.125
    %v214 = vmul.f32 %v109, 0.125
    %v215 = vmul.f32 %v115, 0.125
    %v216 = vmul.f32 %v121, 0.125
    %v217 = vmul.f32 %v127, 0.125
    %v218 = vmul.f32 %v133, 0.125
    %v219 = vmul.f32 %v141, 0.125
    %v220 = vmul.f32 %v147, 0.125
    %v221 = vmul.f32 %v153, 0.125
    %v222 = vmul.f32 %v159, 0.125
    %v223 = vmul.f32 %v165, 0.125
    %v224 = vmul.f32 %v171, 0.125
    %v225 = vmul.f32 %v177, 0.125
    %v226 = vmul.f32 %v183, 0.125
    %v227 = vmul.f32 %v189, 0.125
    %v228 = vmul.f32 %v195, 0.125
    %v229 = vmul.f32 %v201, 0.125
    %v230 = vmul.f32 %v208, 0.125
    %v231 = vadd.f32 %v52, 1e-05
    %v232 = vadd.f32 %v53, 1e-05
    %v233 = vadd.f32 %v54, 1e-05
    %v234 = vadd.f32 %v55, 1e-05
    %v235 = vadd.f32 %v56, 1e-05
    %v236 = vadd.f32 %v57, 1e-05
    %v237 = vadd.f32 %v58, 1e-05
    %v238 = vadd.f32 %v59, 1e-05
    %v239 = vadd.f32 %v60, 1e-05
    %v240 = vadd.f32 %v61, 1e-05
    %v241 = vadd.f32 %v62, 1e-05
    %v242 = vadd.f32 %v63, 1e-05
    %v243 = vadd.f32 %v64, 1e-05
    %v244 = vadd.f32 %v65, 1e-05
    %v245 = vadd.f32 %v66, 1e-05
    %v246 = vadd.f32 %v67, 1e-05
    %v247 = vadd.f32 %v68, 1e-05
    %v248 = vadd.f32 %v69, 1e-05
    %v249 = vadd.f32 %v70, 1e-05
    %v250 = vadd.f32 %v71, 1e-05
    %v251 = vadd.f32 %v72, 1e-05
    %v252 = vadd.f32 %v73, 1e-05
    %v253 = vlog2.pop %v231
    %v254 = vmul.f32 %v253, 0.6931472
    %v255 = vlog2.pop %v232
    %v256 = vmul.f32 %v255, 0.6931472
    %v257 = vlog2.pop %v233
    %v258 = vmul.f32 %v257, 0.6931472
    %v259 = vlog2.pop %v234
    %v260 = vmul.f32 %v259, 0.6931472
    %v261 = vlog2.pop %v235
    %v262 = vmul.f32 %v261, 0.6931472
    %v263 = vlog2.pop %v236
    %v264 = vmul.f32 %v263, 0.6931472
    %v265 = vlog2.pop %v237
    %v266 = vmul.f32 %v265, 0.6931472
    %v267 = vlog2.pop %v238
    %v268 = vmul.f32 %v267, 0.6931472
    %v269 = vlog2.pop %v239
    %v270 = vmul.f32 %v269, 0.6931472
    %v271 = vlog2.pop %v240
    %v272 = vmul.f32 %v271, 0.6931472
    %v273 = vlog2.pop %v241
    %v274 = vmul.f32 %v273, 0.6931472
    %v275 = vlog2.pop %v242
    %v276 = vmul.f32 %v275, 0.6931472
    %v277 = vlog2.pop %v243
    %v278 = vmul.f32 %v277, 0.6931472
    %v279 = vlog2.pop %v244
    %v280 = vmul.f32 %v279, 0.6931472
    %v281 = vlog2.pop %v245
    %v282 = vmul.f32 %v281, 0.6931472
    %v283 = vlog2.pop %v246
    %v284 = vmul.f32 %v283, 0.6931472
    %v285 = vlog2.pop %v247
    %v286 = vmul.f32 %v285, 0.6931472
    %v287 = vlog2.pop %v248
    %v288 = vmul.f32 %v287, 0.6931472
    %v289 = vlog2.pop %v249
    %v290 = vmul.f32 %v289, 0.6931472
    %v291 = vlog2.pop %v250
    %v292 = vmul.f32 %v291, 0.6931472
    %v293 = vlog2.pop %v251
    %v294 = vmul.f32 %v293, 0.6931472
    %v295 = vlog2.pop %v252
    %v296 = vmul.f32 %v295, 0.6931472
    %v297 = vrot.slane %v254, 4
    %v298 = vadd.f32 %v254, %v297
    %v299 = vrot.slane %v298, 2
    %v300 = vadd.f32 %v298, %v299
    %v301 = vrot.slane %v300, 1
    %v302 = vadd.f32 %v300, %v301
    %v303 = vrot.slane %v256, 4
    %v304 = vadd.f32 %v256, %v303
    %v305 = vrot.slane %v304, 2
    %v306 = vadd.f32 %v304, %v305
    %v307 = vrot.slane %v306, 1
    %v308 = vadd.f32 %v306, %v307
    %v309 = vrot.slane %v258, 4
    %v310 = vadd.f32 %v258, %v309
    %v311 = vrot.slane %v310, 2
    %v312 = vadd.f32 %v310, %v311
    %v313 = vrot.slane %v312, 1
    %v314 = vadd.f32 %v312, %v313
    %v315 = vrot.slane %v260, 4
    %v316 = vadd.f32 %v260, %v315
    %v317 = vrot.slane %v316, 2
    %v318 = vadd.f32 %v316, %v317
    %v319 = vrot.slane %v318, 1
    %v320 = vadd.f32 %v318, %v319
    %v321 = vrot.slane %v262, 4
    %v322 = vadd.f32 %v262, %v321
    %v323 = vrot.slane %v322, 2
    %v324 = vadd.f32 %v322, %v323
    %v325 = vrot.slane %v324, 1
    %v326 = vadd.f32 %v324, %v325
    %v327 = vrot.slane %v264, 4
    %v328 = vadd.f32 %v264, %v327
    %v329 = vrot.slane %v328, 2
    %v330 = vadd.f32 %v328, %v329
    %v331 = vrot.slane %v330, 1
    %v332 = vadd.f32 %v330, %v331
    %v333 = vrot.slane %v266, 4
    %v334 = vadd.f32 %v266, %v333
    %v335 = vrot.slane %v334, 2
    %v336 = vadd.f32 %v334, %v335
    %v337 = vrot.slane %v336, 1
    %v338 = vadd.f32 %v336, %v337
    %v339 = vrot.slane %v268, 4
    %v340 = vadd.f32 %v268, %v339
    %v341 = vrot.slane %v340, 2
    %v342 = vadd.f32 %v340, %v341
    %v343 = vrot.slane %v342, 1
    %v344 = vadd.f32 %v342, %v343
    %v345 = vrot.slane %v270, 4
    %v346 = vadd.f32 %v270, %v345
    %v347 = vrot.slane %v346, 2
    %v348 = vadd.f32 %v346, %v347
    %v349 = vrot.slane %v348, 1
    %v350 = vadd.f32 %v348, %v349
    %v351 = vrot.slane %v272, 4
    %v352 = vadd.f32 %v272, %v351
    %v353 = vrot.slane %v352, 2
    %v354 = vadd.f32 %v352, %v353
    %v355 = vrot.slane %v354, 1
    %v356 = vadd.f32 %v354, %v355
    %v357 = vsel %vm134, %v274, 0.0
    %v358 = vrot.slane %v357, 4
    %v359 = vadd.f32 %v357, %v358
    %v360 = vrot.slane %v359, 2
    %v361 = vadd.f32 %v359, %v360
    %v362 = vrot.slane %v361, 1
    %v363 = vadd.f32 %v361, %v362
    %v364 = vrot.slane %v276, 4
    %v365 = vadd.f32 %v276, %v364
    %v366 = vrot.slane %v365, 2
    %v367 = vadd.f32 %v365, %v366
    %v368 = vrot.slane %v367, 1
    %v369 = vadd.f32 %v367, %v368
    %v370 = vrot.slane %v278, 4
    %v371 = vadd.f32 %v278, %v370
    %v372 = vrot.slane %v371, 2
    %v373 = vadd.f32 %v371, %v372
    %v374 = vrot.slane %v373, 1
    %v375 = vadd.f32 %v373, %v374
    %v376 = vrot.slane %v280, 4
    %v377 = vadd.f32 %v280, %v376
    %v378 = vrot.slane %v377, 2
    %v379 = vadd.f32 %v377, %v378
    %v380 = vrot.slane %v379, 1
    %v381 = vadd.f32 %v379, %v380
    %v382 = vrot.slane %v282, 4
    %v383 = vadd.f32 %v282, %v382
    %v384 = vrot.slane %v383, 2
    %v385 = vadd.f32 %v383, %v384
    %v386 = vrot.slane %v385, 1
    %v387 = vadd.f32 %v385, %v386
    %v388 = vrot.slane %v284, 4
    %v389 = vadd.f32 %v284, %v388
    %v390 = vrot.slane %v389, 2
    %v391 = vadd.f32 %v389, %v390
    %v392 = vrot.slane %v391, 1
    %v393 = vadd.f32 %v391, %v392
    %v394 = vrot.slane %v286, 4
    %v395 = vadd.f32 %v286, %v394
    %v396 = vrot.slane %v395, 2
    %v397 = vadd.f32 %v395, %v396
    %v398 = vrot.slane %v397, 1
    %v399 = vadd.f32 %v397, %v398
    %v400 = vrot.slane %v288, 4
    %v401 = vadd.f32 %v288, %v400
    %v402 = vrot.slane %v401, 2
    %v403 = vadd.f32 %v401, %v402
    %v404 = vrot.slane %v403, 1
    %v405 = vadd.f32 %v403, %v404
    %v406 = vrot.slane %v290, 4
    %v407 = vadd.f32 %v290, %v406
    %v408 = vrot.slane %v407, 2
    %v409 = vadd.f32 %v407, %v408
    %v410 = vrot.slane %v409, 1
    %v411 = vadd.f32 %v409, %v410
    %v412 = vrot.slane %v292, 4
    %v413 = vadd.f32 %v292, %v412
    %v414 = vrot.slane %v413, 2
    %v415 = vadd.f32 %v413, %v414
    %v416 = vrot.slane %v415, 1
    %v417 = vadd.f32 %v415, %v416
    %v418 = vrot.slane %v294, 4
    %v419 = vadd.f32 %v294, %v418
    %v420 = vrot.slane %v419, 2
    %v421 = vadd.f32 %v419, %v420
    %v422 = vrot.slane %v421, 1
    %v423 = vadd.f32 %v421, %v422
    %v424 = vsel %vm134, %v296, 0.0
    %v425 = vrot.slane %v424, 4
    %v426 = vadd.f32 %v424, %v425
    %v427 = vrot.slane %v426, 2
    %v428 = vadd.f32 %v426, %v427
    %v429 = vrot.slane %v428, 1
    %v430 = vadd.f32 %v428, %v429
    %v431 = vmul.f32 %v302, 0.125
    %v432 = vmul.f32 %v308, 0.125
    %v433 = vmul.f32 %v314, 0.125
    %v434 = vmul.f32 %v320, 0.125
    %v435 = vmul.f32 %v326, 0.125
    %v436 = vmul.f32 %v332, 0.125
    %v437 = vmul.f32 %v338, 0.125
    %v438 = vmul.f32 %v344, 0.125
    %v439 = vmul.f32 %v350, 0.125
    %v440 = vmul.f32 %v356, 0.125
    %v441 = vmul.f32 %v363, 0.125
    %v442 = vmul.f32 %v369, 0.125
    %v443 = vmul.f32 %v375, 0.125
    %v444 = vmul.f32 %v381, 0.125
    %v445 = vmul.f32 %v387, 0.125
    %v446 = vmul.f32 %v393, 0.125
    %v447 = vmul.f32 %v399, 0.125
    %v448 = vmul.f32 %v405, 0.125
    %v449 = vmul.f32 %v411, 0.125
    %v450 = vmul.f32 %v417, 0.125
    %v451 = vmul.f32 %v423, 0.125
    %v452 = vmul.f32 %v430, 0.125
    %v453 = vld [vmem:[#allocation5] sm:$0xff]
    %v454 = vld [vmem:[#allocation5 + $0x8] sm:$0xff]
    %v455 = vld [vmem:[#allocation5 + $0x10] sm:$0x3f]
    %v456 = vld [vmem:[#allocation7] sm:$0xff]
    %v457 = vld [vmem:[#allocation7 + $0x8] sm:$0xff]
    %v458 = vld [vmem:[#allocation7 + $0x10] sm:$0x3f]
    %v481 = vcombine.low %v431, %v432
    %v482 = vcombine.low %v433, %v434
    %v484 = vunpack.c.l.s4 1983009808
    %v485 = vunpack.c.0.s8 %v484
    %v486 = vlaneseq
    %v487 = vshrl.u32 %v486, 7
    %v488 = vsub.s32 %v485, %v487
    %v489 = vrot.slane %v481, %v488
    %v491 = vunpack.c.l.s4 1983009808
    %v492 = vunpack.c.0.s8 %v491
    %v493 = vlaneseq
    %v494 = vshrl.u32 %v493, 7
    %v495 = vsub.s32 %v492, %v494
    %v496 = vrot.slane %v482, %v495
    %v497 = vcombine.low %v489, %v496
    %v498 = vcombine.low %v435, %v436
    %v499 = vcombine.low %v437, %v438
    %v501 = vunpack.c.l.s4 1983009808
    %v502 = vunpack.c.0.s8 %v501
    %v503 = vlaneseq
    %v504 = vshrl.u32 %v503, 7
    %v505 = vsub.s32 %v502, %v504
    %v506 = vrot.slane %v498, %v505
    %v508 = vunpack.c.l.s4 1983009808
    %v509 = vunpack.c.0.s8 %v508
    %v510 = vlaneseq
    %v511 = vshrl.u32 %v510, 7
    %v512 = vsub.s32 %v509, %v511
    %v513 = vrot.slane %v499, %v512
    %v514 = vcombine.low %v506, %v513
    %v515 = vcombine.low %v439, %v440
    %v517 = vunpack.c.l.s4 1983009808
    %v518 = vunpack.c.0.s8 %v517
    %v519 = vlaneseq
    %v520 = vshrl.u32 %v519, 7
    %v521 = vsub.s32 %v518, %v520
    %v522 = vrot.slane %v515, %v521
    %v524 = vunpack.c.l.s4 1983009808
    %v525 = vunpack.c.0.s8 %v524
    %v526 = vlaneseq
    %v527 = vshrl.u32 %v526, 7
    %v528 = vsub.s32 %v525, %v527
    %v529 = vrot.slane %v441, %v528
    %v530 = vcombine.low %v522, %v529
    %v531 = vcombine.low %v442, %v443
    %v532 = vcombine.low %v444, %v445
    %v534 = vunpack.c.l.s4 1983009808
    %v535 = vunpack.c.0.s8 %v534
    %v536 = vlaneseq
    %v537 = vshrl.u32 %v536, 7
    %v538 = vsub.s32 %v535, %v537
    %v539 = vrot.slane %v531, %v538
    %v541 = vunpack.c.l.s4 1983009808
    %v542 = vunpack.c.0.s8 %v541
    %v543 = vlaneseq
    %v544 = vshrl.u32 %v543, 7
    %v545 = vsub.s32 %v542, %v544
    %v546 = vrot.slane %v532, %v545
    %v547 = vcombine.low %v539, %v546
    %v548 = vcombine.low %v446, %v447
    %v549 = vcombine.low %v448, %v449
    %v551 = vunpack.c.l.s4 1983009808
    %v552 = vunpack.c.0.s8 %v551
    %v553 = vlaneseq
    %v554 = vshrl.u32 %v553, 7
    %v555 = vsub.s32 %v552, %v554
    %v556 = vrot.slane %v548, %v555
    %v558 = vunpack.c.l.s4 1983009808
    %v559 = vunpack.c.0.s8 %v558
    %v560 = vlaneseq
    %v561 = vshrl.u32 %v560, 7
    %v562 = vsub.s32 %v559, %v561
    %v563 = vrot.slane %v549, %v562
    %v564 = vcombine.low %v556, %v563
    %v565 = vcombine.low %v450, %v451
    %v567 = vunpack.c.l.s4 1983009808
    %v568 = vunpack.c.0.s8 %v567
    %v569 = vlaneseq
    %v570 = vshrl.u32 %v569, 7
    %v571 = vsub.s32 %v568, %v570
    %v572 = vrot.slane %v565, %v571
    %v574 = vunpack.c.l.s4 1983009808
    %v575 = vunpack.c.0.s8 %v574
    %v576 = vlaneseq
    %v577 = vshrl.u32 %v576, 7
    %v578 = vsub.s32 %v575, %v577
    %v579 = vrot.slane %v452, %v578
    %v580 = vcombine.low %v572, %v579
    %vm581 = vcmask 1044484
    %v582 = vsel %vm581, %v497, %v497
    %vm583 = vcmask 1046534
    %v584 = vsel %vm583, %v497, %v582
    %v585 = vrot.slane %v547, 7
    %vm586 = vcmask 1041409
    %v587 = vsel %vm586, %v585, %v584
    %vm588 = vcmask 1043459
    %v589 = vsel %vm588, %v585, %v587
    %vm590 = vcmask 1045509
    %v591 = vsel %vm590, %v585, %v589
    %vm592 = vcmask 1047559
    %v593 = vsel %vm592, %v585, %v591
    %v594 = vsel %vm581, %v514, %v514
    %v595 = vsel %vm583, %v514, %v594
    %v596 = vrot.slane %v564, 7
    %v597 = vsel %vm586, %v596, %v595
    %v598 = vsel %vm588, %v596, %v597
    %v599 = vsel %vm590, %v596, %v598
    %v600 = vsel %vm592, %v596, %v599
    %v601 = vsel %vm581, %v530, %v530
    %v602 = vsel %vm583, %v530, %v601
    %v603 = vrot.slane %v580, 7
    %v604 = vsel %vm586, %v603, %v602
    %v605 = vsel %vm588, %v603, %v604
    %v606 = vsel %vm590, %v603, %v605
    %v607 = vsel %vm592, %v603, %v606
    %v611 = vmul.f32 %v453, %v593
    %v612 = vmul.f32 %v454, %v600
    %v613 = vmul.f32 %v455, %v607
    %v636 = vcombine.low %v209, %v210
    %v637 = vcombine.low %v211, %v212
    %v639 = vunpack.c.l.s4 1983009808
    %v640 = vunpack.c.0.s8 %v639
    %v641 = vlaneseq
    %v642 = vshrl.u32 %v641, 7
    %v643 = vsub.s32 %v640, %v642
    %v644 = vrot.slane %v636, %v643
    %v646 = vunpack.c.l.s4 1983009808
    %v647 = vunpack.c.0.s8 %v646
    %v648 = vlaneseq
    %v649 = vshrl.u32 %v648, 7
    %v650 = vsub.s32 %v647, %v649
    %v651 = vrot.slane %v637, %v650
    %v652 = vcombine.low %v644, %v651
    %v653 = vcombine.low %v213, %v214
    %v654 = vcombine.low %v215, %v216
    %v656 = vunpack.c.l.s4 1983009808
    %v657 = vunpack.c.0.s8 %v656
    %v658 = vlaneseq
    %v659 = vshrl.u32 %v658, 7
    %v660 = vsub.s32 %v657, %v659
    %v661 = vrot.slane %v653, %v660
    %v663 = vunpack.c.l.s4 1983009808
    %v664 = vunpack.c.0.s8 %v663
    %v665 = vlaneseq
    %v666 = vshrl.u32 %v665, 7
    %v667 = vsub.s32 %v664, %v666
    %v668 = vrot.slane %v654, %v667
    %v669 = vcombine.low %v661, %v668
    %v670 = vcombine.low %v217, %v218
    %v672 = vunpack.c.l.s4 1983009808
    %v673 = vunpack.c.0.s8 %v672
    %v674 = vlaneseq
    %v675 = vshrl.u32 %v674, 7
    %v676 = vsub.s32 %v673, %v675
    %v677 = vrot.slane %v670, %v676
    %v679 = vunpack.c.l.s4 1983009808
    %v680 = vunpack.c.0.s8 %v679
    %v681 = vlaneseq
    %v682 = vshrl.u32 %v681, 7
    %v683 = vsub.s32 %v680, %v682
    %v684 = vrot.slane %v219, %v683
    %v685 = vcombine.low %v677, %v684
    %v686 = vcombine.low %v220, %v221
    %v687 = vcombine.low %v222, %v223
    %v689 = vunpack.c.l.s4 1983009808
    %v690 = vunpack.c.0.s8 %v689
    %v691 = vlaneseq
    %v692 = vshrl.u32 %v691, 7
    %v693 = vsub.s32 %v690, %v692
    %v694 = vrot.slane %v686, %v693
    %v696 = vunpack.c.l.s4 1983009808
    %v697 = vunpack.c.0.s8 %v696
    %v698 = vlaneseq
    %v699 = vshrl.u32 %v698, 7
    %v700 = vsub.s32 %v697, %v699
    %v701 = vrot.slane %v687, %v700
    %v702 = vcombine.low %v694, %v701
    %v703 = vcombine.low %v224, %v225
    %v704 = vcombine.low %v226, %v227
    %v706 = vunpack.c.l.s4 1983009808
    %v707 = vunpack.c.0.s8 %v706
    %v708 = vlaneseq
    %v709 = vshrl.u32 %v708, 7
    %v710 = vsub.s32 %v707, %v709
    %v711 = vrot.slane %v703, %v710
    %v713 = vunpack.c.l.s4 1983009808
    %v714 = vunpack.c.0.s8 %v713
    %v715 = vlaneseq
    %v716 = vshrl.u32 %v715, 7
    %v717 = vsub.s32 %v714, %v716
    %v718 = vrot.slane %v704, %v717
    %v719 = vcombine.low %v711, %v718
    %v720 = vcombine.low %v228, %v229
    %v722 = vunpack.c.l.s4 1983009808
    %v723 = vunpack.c.0.s8 %v722
    %v724 = vlaneseq
    %v725 = vshrl.u32 %v724, 7
    %v726 = vsub.s32 %v723, %v725
    %v727 = vrot.slane %v720, %v726
    %v729 = vunpack.c.l.s4 1983009808
    %v730 = vunpack.c.0.s8 %v729
    %v731 = vlaneseq
    %v732 = vshrl.u32 %v731, 7
    %v733 = vsub.s32 %v730, %v732
    %v734 = vrot.slane %v230, %v733
    %v735 = vcombine.low %v727, %v734
    %v736 = vsel %vm581, %v652, %v652
    %v737 = vsel %vm583, %v652, %v736
    %v738 = vrot.slane %v702, 7
    %v739 = vsel %vm586, %v738, %v737
    %v740 = vsel %vm588, %v738, %v739
    %v741 = vsel %vm590, %v738, %v740
    %v742 = vsel %vm592, %v738, %v741
    %v743 = vsel %vm581, %v669, %v669
    %v744 = vsel %vm583, %v669, %v743
    %v745 = vrot.slane %v719, 7
    %v746 = vsel %vm586, %v745, %v744
    %v747 = vsel %vm588, %v745, %v746
    %v748 = vsel %vm590, %v745, %v747
    %v749 = vsel %vm592, %v745, %v748
    %v750 = vsel %vm581, %v685, %v685
    %v751 = vsel %vm583, %v685, %v750
    %v752 = vrot.slane %v735, 7
    %v753 = vsel %vm586, %v752, %v751
    %v754 = vsel %vm588, %v752, %v753
    %v755 = vsel %vm590, %v752, %v754
    %v756 = vsel %vm592, %v752, %v755
    %v760 = vmul.f32 %v456, %v742
    %v761 = vmul.f32 %v457, %v749
    %v762 = vmul.f32 %v458, %v756
    %v763 = vsub.f32 %v611, %v760
    %v764 = vsub.f32 %v612, %v761
    %v765 = vsub.f32 %v613, %v762
    %v769 = vcombine.high %v763, %v763
    %v771 = vunpack.c.l.s4 1983009808
    %v772 = vunpack.c.0.s8 %v771
    %v773 = vlaneseq
    %v774 = vshrl.u32 %v773, 7
    %v775 = vsub.s32 %v772, %v774
    %v776 = vrot.slane %v763, %v775
    %v778 = vunpack.c.l.s4 1983009808
    %v779 = vunpack.c.0.s8 %v778
    %v780 = vlaneseq
    %v781 = vshrl.u32 %v780, 7
    %v782 = vsub.s32 %v779, %v781
    %v783 = vrot.slane %v769, %v782
    %v784 = vcombine.high %v776, %v776
    %v785 = vcombine.high %v783, %v783
    %v786 = vcombine.high %v764, %v764
    %v788 = vunpack.c.l.s4 1983009808
    %v789 = vunpack.c.0.s8 %v788
    %v790 = vlaneseq
    %v791 = vshrl.u32 %v790, 7
    %v792 = vsub.s32 %v789, %v791
    %v793 = vrot.slane %v764, %v792
    %v795 = vunpack.c.l.s4 1983009808
    %v796 = vunpack.c.0.s8 %v795
    %v797 = vlaneseq
    %v798 = vshrl.u32 %v797, 7
    %v799 = vsub.s32 %v796, %v798
    %v800 = vrot.slane %v786, %v799
    %v801 = vcombine.high %v793, %v793
    %v802 = vcombine.high %v800, %v800
    %v803 = vcombine.high %v765, %v765
    %v805 = vunpack.c.l.s4 1983009808
    %v806 = vunpack.c.0.s8 %v805
    %v807 = vlaneseq
    %v808 = vshrl.u32 %v807, 7
    %v809 = vsub.s32 %v806, %v808
    %v810 = vrot.slane %v765, %v809
    %v812 = vunpack.c.l.s4 1983009808
    %v813 = vunpack.c.0.s8 %v812
    %v814 = vlaneseq
    %v815 = vshrl.u32 %v814, 7
    %v816 = vsub.s32 %v813, %v815
    %v817 = vrot.slane %v803, %v816
    %v818 = vcombine.high %v810, %v810
    %vm830 = vcmask 1041408
    %v831 = vsel %vm830, %v776, 0.0
    %v832 = vsel %vm830, %v784, 0.0
    %v833 = vadd.f32 %v831, %v832
    %v834 = vsel %vm830, %v783, 0.0
    %v835 = vadd.f32 %v833, %v834
    %v836 = vsel %vm830, %v785, 0.0
    %v837 = vadd.f32 %v835, %v836
    %v838 = vsel %vm830, %v793, 0.0
    %v839 = vadd.f32 %v837, %v838
    %v840 = vsel %vm830, %v801, 0.0
    %v841 = vadd.f32 %v839, %v840
    %v842 = vsel %vm830, %v800, 0.0
    %v843 = vadd.f32 %v841, %v842
    %v844 = vsel %vm830, %v802, 0.0
    %v845 = vadd.f32 %v843, %v844
    %v846 = vsel %vm830, %v810, 0.0
    %v847 = vadd.f32 %v845, %v846
    %v848 = vsel %vm830, %v818, 0.0
    %v849 = vadd.f32 %v847, %v848
    %vm850 = vcmask 345088
    %v851 = vsel %vm850, %v817, 0.0
    %v852 = vadd.f32 %v849, %v851
    %853 = vadd.xlane.f32.xlu0 %v852
    %v854 = vpop.xlane.xlu0 %853
    %v855 = vsub.f32 0.0, %v854
    %v856 = vlaneseq
    %v857 = vand.u32 %v856, 127
    %vm858 = vcmp.eq.s32.totalorder %v857, 0
    %v859 = vsel %vm858, %v855, 0.0
    %v860 = vadd.f32 %v859, 0.0
    %861 = vst [vmem:[#allocation8] sm:$0x3] %v860
    // Predicated region
    $region26: #{tpu_custom_call.1} parent=1 // pred_check
      _
    $region27: #{tpu_custom_call.1} parent=1 // pred_check_branch
      %863 = sbr.rel (0) target = $region29
    $region28: #{tpu_custom_call.1} parent=1 // pred_region
      %s865 = ssub.s32 32, 32
      %866 = vsyncadd [#allocation4], %s865
      %s868 = sshll.u32 [#allocation8], 4
      %s869 = int_to_ptr.vmem [resolvable:$true] %s868
      %871 = dma.vmem_to_hbm [thread:$0]  %s869, 32, %s3, [#allocation4]
    $region29: #{tpu_custom_call.1} parent=1 // pred_fallthru
      _
    // Predicated region
    $region30: #{tpu_custom_call.1} parent=1 // pred_check
      _
    $region31: #{tpu_custom_call.1} parent=1 // pred_check_branch
      %873 = sbr.rel (0) target = $region33
    $region32: #{tpu_custom_call.1} parent=1 // pred_region
      %874 = dma.done [#allocation4], 32
    $region33: #{tpu_custom_call.1} parent=1 // pred_fallthru
      _
    %875 = vsyncpa [#allocation3], 1
    %876 = vsyncpa [#allocation6], 1
    %877 = vsyncpa [#allocation4], 1

</llo_original>
